<compile_context>
chip_gen: v6e
topology: v6e:2x2x1
jax: 0.10.0
libtpu: 0.0.40
codegen_flags: <defaults>
</compile_context>

<pallas_src>
import functools
import math

import jax
import jax.numpy as jnp
from jax import lax
from jax.experimental import pallas as pl
from jax.experimental.pallas import tpu as pltpu

LANE = 128                       # TPU lane width; channel-like dims pad to it.
VMEM_LIMIT = 64 * 1024 * 1024    # explicit scoped-VMEM budget (toy usage ~2 MiB)


def _round_up(x, m):
    return ((x + m - 1) // m) * m


def _const_spec(shape):
    """Block spec for an operand whose block is the same at every grid step.

    Single-buffered (pl.Buffered(1)): double-buffering a constant block only
    duplicates it in VMEM (at real VGG sizes a 9*512*512 bf16 conv weight is
    ~4.5 MiB -- relevant under v7x's 64 MiB VMEM)."""
    return pl.BlockSpec(shape, lambda *_: (0,) * len(shape),
                        pipeline_mode=pl.Buffered(buffer_count=1))


def _batch_tile(n, want=2):
    """Images per grid step: >=2 rows of M per MXU push, but keep the grid."""
    return want if n % want == 0 else 1


# ----------------------------------------------------------------------------
# Shared f32 epilogue: bias + ReLU (+ fused 2x2 maxpool) + store.
# ----------------------------------------------------------------------------
def _bias_relu_pool_store(acc, b_ref, o_ref, *, pool, bt, h, w):
    coutp = o_ref.shape[-1]
    acc = jnp.maximum(acc + b_ref[...], 0.0)          # f32 VPU epilogue
    if pool:
        ho, wo = h // 2, w // 2
        # Row-pair max: splitting H is a leading-dim reshape (free addressing),
        # the reduce is pure VPU work on full vregs.
        y = acc.reshape(bt, ho, 2, w, coutp)
        y = jnp.max(y, axis=2)
        # Column-pair max: the only sublane re-tile, and it runs on the
        # already-halved data (half the copy traffic of the old 5-D version).
        y = y.reshape(bt, ho, wo, 2, coutp)
        y = jnp.max(y, axis=3)
    else:
        y = acc.reshape(bt, h, w, coutp)
    o_ref[...] = y.astype(o_ref.dtype)


# ----------------------------------------------------------------------------
# Fused Conv2d(3x3, padding=1) + ReLU [+ MaxPool2d(2,2)] for lane-padded Cin.
#   - im2col patches built once into a VMEM scratch (each element written
#     exactly once): dy via leading-dim destination slices, dx via pltpu.roll
#     along the sublane axis + border mask.
#   - one wide MXU matmul (K = 9 * Cin_padded), f32 accumulation.
# ----------------------------------------------------------------------------
def _conv3x3_kernel(x_ref, w_ref, b_ref, o_ref, patch_ref, *, pool):
    bt, h, w, cp = x_ref.shape
    x = x_ref[...]

    def write_dy(v, dx):
        # dy shifts expressed purely as leading-dim (H) destination slices;
        # lane offsets are multiples of cp (=128) -> lane-aligned stores.
        for dy in range(3):
            lane = slice((3 * dy + dx) * cp, (3 * dy + dx + 1) * cp)
            if dy == 0:            # output row y reads source row y-1
                patch_ref[:, 1:h, :, lane] = v[:, 0:h - 1]
            elif dy == 1:
                patch_ref[:, :, :, lane] = v
            else:                  # output row y reads source row y+1
                patch_ref[:, 0:h - 1, :, lane] = v[:, 1:h]

    # Zero ONLY the 6 uncovered border rows (dy=0 slots: row 0, dy=2 slots:
    # row h-1), every grid step -- the batch axis is "parallel", so this must
    # not be hidden behind pl.when(program_id == 0).
    patch_ref[:, 0:1, :, 0:3 * cp] = jnp.zeros((bt, 1, w, 3 * cp), x.dtype)
    patch_ref[:, h - 1:h, :, 6 * cp:9 * cp] = jnp.zeros((bt, 1, w, 3 * cp),
                                                        x.dtype)

    # dx = 1 (centre column): no shift.
    write_dy(x, 1)
    # dx = 0 / 2: shift along W (the sublane axis) on the XLU via pltpu.roll
    # and zero the wrapped-around column (VPU select) -- no sublane-misaligned
    # slice copies on the saturated store slot.
    col = lax.broadcasted_iota(jnp.int32, (bt, h, w, cp), 2)
    zero = jnp.zeros_like(x)
    write_dy(jnp.where(col == 0, zero, pltpu.roll(x, shift=1, axis=2)), 0)
    write_dy(jnp.where(col == w - 1, zero,
                       pltpu.roll(x, shift=w - 1, axis=2)), 2)

    # One wide MXU matmul over K = 9*cp with f32 accumulation.
    # TODO(synk): on v7x, replace with 3 MRB-accumulated dots (K = 3*cp) so
    # the dx-shifted taps never need to be materialized at all.
    patches = patch_ref[...].reshape(bt * h * w, 9 * cp)
    acc = jnp.dot(patches, w_ref[...], preferred_element_type=jnp.float32)
    _bias_relu_pool_store(acc, b_ref, o_ref, pool=pool, bt=bt, h=h, w=w)


def conv3x3_relu_pool(x, w_mat, b, *, pool):
    # x: (N, H, W, Cp) channel-padded NHWC; w_mat: (9*Cp, Coutp); b: (1, Coutp)
    n, h, w, cp = x.shape
    coutp = w_mat.shape[-1]
    bt = _batch_tile(n)
    ho, wo = (h // 2, w // 2) if pool else (h, w)
    # TODO(synk): at real VGG sizes (224x224, C<=512) tile H into 28-56-row
    # strips with a 2-row halo; size strips so patches + single-buffered
    # weights + double-buffered activations fit ~48 MiB on v7x (64 MiB
    # physical) and ~100 MiB on v5e/v6e, and pad Cout tiles to 256 on v6e/v7x.
    return pl.pallas_call(
        functools.partial(_conv3x3_kernel, pool=pool),
        out_shape=jax.ShapeDtypeStruct((n, ho, wo, coutp), x.dtype),
        grid=(n // bt,),
        in_specs=[
            pl.BlockSpec((bt, h, w, cp), lambda i: (i, 0, 0, 0)),
            _const_spec(w_mat.shape),
            _const_spec(b.shape),
        ],
        out_specs=pl.BlockSpec((bt, ho, wo, coutp), lambda i: (i, 0, 0, 0)),
        scratch_shapes=[pltpu.VMEM((bt, h, w, 9 * cp), x.dtype)],
        compiler_params=pltpu.CompilerParams(
            dimension_semantics=("parallel",),
            vmem_limit_bytes=VMEM_LIMIT),
    )(x, w_mat, b)


# ----------------------------------------------------------------------------
# First conv layer: patches are pre-extracted in the wrapper (K = 9*Cin = 27
# padded to 128), so the kernel is a plain per-pixel matmul + epilogue.
# ----------------------------------------------------------------------------
def _dense_kernel(x_ref, w_ref, b_ref, o_ref, *, pool):
    bt, h, w, kp = x_ref.shape
    acc = jnp.dot(x_ref[...].reshape(bt * h * w, kp), w_ref[...],
                  preferred_element_type=jnp.float32)
    _bias_relu_pool_store(acc, b_ref, o_ref, pool=pool, bt=bt, h=h, w=w)


def dense_relu_pool(x, w_mat, b, *, pool):
    # x: (N, H, W, Kp) pre-patched / lane-padded; w_mat: (Kp, Coutp)
    n, h, w, kp = x.shape
    coutp = w_mat.shape[-1]
    bt = _batch_tile(n)
    ho, wo = (h // 2, w // 2) if pool else (h, w)
    return pl.pallas_call(
        functools.partial(_dense_kernel, pool=pool),
        out_shape=jax.ShapeDtypeStruct((n, ho, wo, coutp), x.dtype),
        grid=(n // bt,),
        in_specs=[
            pl.BlockSpec((bt, h, w, kp), lambda i: (i, 0, 0, 0)),
            _const_spec(w_mat.shape),
            _const_spec(b.shape),
        ],
        out_specs=pl.BlockSpec((bt, ho, wo, coutp), lambda i: (i, 0, 0, 0)),
        compiler_params=pltpu.CompilerParams(
            dimension_semantics=("parallel",),
            vmem_limit_bytes=VMEM_LIMIT),
    )(x, w_mat, b)


# ----------------------------------------------------------------------------
# Fused classifier: Linear -> ReLU -> (Dropout) -> Linear -> ReLU -> (Dropout)
#                   -> Linear, gridded over 16-row batch tiles.
# ----------------------------------------------------------------------------
def _mlp_kernel(x_ref, w1_ref, b1_ref, w2_ref, b2_ref, w3_ref, b3_ref, o_ref):
    h = jnp.dot(x_ref[...], w1_ref[...], preferred_element_type=jnp.float32)
    h = jnp.maximum(h + b1_ref[...], 0.0)
    # TODO(synk): nn.Dropout is an eval-mode identity here; training-mode
    # random masking/scaling is not implemented.
    h = jnp.dot(h.astype(w2_ref.dtype), w2_ref[...],
                preferred_element_type=jnp.float32)
    h = jnp.maximum(h + b2_ref[...], 0.0)
    y = jnp.dot(h.astype(w3_ref.dtype), w3_ref[...],
                preferred_element_type=jnp.float32)
    o_ref[...] = (y + b3_ref[...]).astype(o_ref.dtype)


def mlp_classifier(x, w1, b1, w2, b2, w3, b3, *, tile_m=16):
    # Caller pads rows to a multiple of tile_m (=16) so bf16 sublane packing
    # is dense; the row-tile grid is "parallel" so v7x can use both cores.
    # TODO(synk): at real VGG sizes (25088x4096 fc1, ~196 MiB bf16) fc1 needs
    # a tiled (M, N, K) grid with a VMEM f32 accumulator (K axis last and
    # "arbitrary", pl.when-guarded init/finalize) -- a resident full-weight
    # block cannot fit VMEM on any generation.
    mp, din = x.shape
    dout = w3.shape[-1]
    return pl.pallas_call(
        _mlp_kernel,
        out_shape=jax.ShapeDtypeStruct((mp, dout), jnp.float32),
        grid=(mp // tile_m,),
        in_specs=[
            pl.BlockSpec((tile_m, din), lambda m: (m, 0)),
            _const_spec(w1.shape), _const_spec(b1.shape),
            _const_spec(w2.shape), _const_spec(b2.shape),
            _const_spec(w3.shape), _const_spec(b3.shape),
        ],
        out_specs=pl.BlockSpec((tile_m, dout), lambda m: (m, 0)),
        compiler_params=pltpu.CompilerParams(
            dimension_semantics=("parallel",),
            vmem_limit_bytes=VMEM_LIMIT),
    )(x, w1, b1, w2, b2, w3, b3)


# ----------------------------------------------------------------------------
# VGG model (scaled-down synthetic sizes, same structure as the torch module)
# ----------------------------------------------------------------------------
class VGGPallas:
    """All layout work (HWIO transpose, im2col weight reshape, 128-lane
    channel padding, classifier transposes and the NCHW-flatten permutation)
    is folded into the weights ONCE at init."""

    def __init__(self, key, cfg, in_channels=3, num_classes=10, image_hw=16,
                 hidden=64, compute_dtype=jnp.bfloat16):
        self.compute_dtype = compute_dtype
        self.num_classes = num_classes

        # Fuse each conv+ReLU with a directly following MaxPool2d(2,2).
        stages = []
        i = 0
        while i < len(cfg):
            c_out = cfg[i]
            assert c_out != 'M', "standalone / leading 'M' not supported"
            pool = i + 1 < len(cfg) and cfg[i + 1] == 'M'
            stages.append((c_out, pool))
            i += 2 if pool else 1

        keys = jax.random.split(key, len(stages) + 3)

        self.feature_layers = []
        c_in, hw = in_channels, image_hw
        for li, (c_out, pool) in enumerate(stages):
            cout_p = _round_up(c_out, LANE)
            # kaiming_normal_(mode='fan_out', nonlinearity='relu'), zero bias.
            fan_out = c_out * 3 * 3
            std = math.sqrt(2.0 / fan_out)
            w_oihw = std * jax.random.normal(keys[li], (c_out, c_in, 3, 3),
                                             jnp.float32)
            w_hwio = jnp.transpose(w_oihw, (2, 3, 1, 0))        # (3,3,Ci,Co)
            if li == 0:
                # First layer: pad the combined im2col axis (9*Cin) to 128
                # instead of padding Cin -> no 27->1152 K blow-up; patch
                # extraction happens once in the wrapper.
                k_raw = 9 * c_in
                self.k1_raw = k_raw
                self.k1_pad = _round_up(k_raw, LANE)
                w_mat = w_hwio.reshape(k_raw, c_out)
                w_mat = jnp.pad(w_mat, ((0, self.k1_pad - k_raw),
                                        (0, cout_p - c_out)))
                kind = "first"
            else:
                cin_p = _round_up(c_in, LANE)
                w_hwio = jnp.pad(w_hwio, ((0, 0), (0, 0),
                                          (0, cin_p - c_in),
                                          (0, cout_p - c_out)))
                w_mat = w_hwio.reshape(9 * cin_p, cout_p)
                kind = "conv"
            b = jnp.zeros((1, cout_p), jnp.float32)
            self.feature_layers.append(
                (kind, w_mat.astype(compute_dtype), b, pool))
            c_in = c_out
            if pool:
                hw //= 2

        # Classifier (torch: 512*7*7 -> 4096 -> 4096 -> classes; scaled down).
        feat_c, feat_hw = c_in, hw
        feat_cp = _round_up(feat_c, LANE)
        hid_p = _round_up(hidden, LANE)
        cls_p = _round_up(num_classes, LANE)
        ki = len(stages)

        # fc1: N(0, 0.01) in torch layout (hidden, C*H*W); fold the NCHW
        # flatten order and the NHWC channel padding into its columns.
        w1 = 0.01 * jax.random.normal(
            keys[ki], (hidden, feat_c * feat_hw * feat_hw), jnp.float32)
        w1 = w1.reshape(hidden, feat_c, feat_hw, feat_hw)
        w1 = jnp.transpose(w1, (2, 3, 1, 0))                    # (H,W,C,hid)
        w1 = jnp.pad(w1, ((0, 0), (0, 0), (0, feat_cp - feat_c),
                          (0, hid_p - hidden)))
        self.w1 = w1.reshape(feat_hw * feat_hw * feat_cp,
                             hid_p).astype(compute_dtype)
        self.b1 = jnp.zeros((1, hid_p), jnp.float32)

        w2 = 0.01 * jax.random.normal(keys[ki + 1], (hidden, hidden),
                                      jnp.float32)
        self.w2 = jnp.pad(jnp.transpose(w2),
                          ((0, hid_p - hidden),
                           (0, hid_p - hidden))).astype(compute_dtype)
        self.b2 = jnp.zeros((1, hid_p), jnp.float32)

        w3 = 0.01 * jax.random.normal(keys[ki + 2], (num_classes, hidden),
                                      jnp.float32)
        self.w3 = jnp.pad(jnp.transpose(w3),
                          ((0, hid_p - hidden),
                           (0, cls_p - num_classes))).astype(compute_dtype)
        self.b3 = jnp.zeros((1, cls_p), jnp.float32)

    def _first_layer_patches(self, x_nhwc):
        # Wrapper-side im2col for the first conv only (tiny f32 input).
        n, h, w, c = x_nhwc.shape
        xp = jnp.pad(x_nhwc, ((0, 0), (1, 1), (1, 1), (0, 0)))
        taps = [xp[:, dy:dy + h, dx:dx + w, :]
                for dy in range(3) for dx in range(3)]
        pat = jnp.concatenate(taps, axis=-1)                    # (N,H,W,9*Cin)
        pat = jnp.pad(pat, ((0, 0), (0, 0), (0, 0),
                            (0, self.k1_pad - self.k1_raw)))
        return pat.astype(self.compute_dtype)

    def __call__(self, x_nchw):
        n = x_nchw.shape[0]
        x = jnp.transpose(x_nchw, (0, 2, 3, 1))       # NCHW -> NHWC, once
        for kind, w_mat, b, pool in self.feature_layers:
            if kind == "first":
                x = dense_relu_pool(self._first_layer_patches(x), w_mat, b,
                                    pool=pool)
            else:
                x = conv3x3_relu_pool(x, w_mat, b, pool=pool)
        # torch's x.view(N, -1): the NCHW-order permutation + channel padding
        # are pre-folded into w1's columns, so a plain NHWC flatten suffices.
        x = x.reshape(n, -1)
        # Pad batch rows to a dense 16-row bf16 tile for the classifier grid.
        mp = _round_up(n, 16)
        if mp != n:
            x = jnp.pad(x, ((0, mp - n), (0, 0)))
        y = mlp_classifier(x, self.w1, self.b1, self.w2, self.b2,
                           self.w3, self.b3, tile_m=16)
        return y[:n, :self.num_classes]   # drop batch + lane padding


if __name__ == "__main__":
    key = jax.random.PRNGKey(0)
    k_param, k_x = jax.random.split(key)

    # Scaled-down VGG feature config: [conv8, conv8, 'M', conv16, 'M'];
    # 16x16 input -> (16, 4, 4) features -> flat 256 -> 64 -> 64 -> 10 classes.
    cfg = [8, 8, 'M', 16, 'M']
    model = VGGPallas(k_param, cfg, in_channels=3, num_classes=10,
                      image_hw=16, hidden=64)

    # Batch 4: two images per conv grid step while keeping 2 grid steps.
    x = jax.random.normal(k_x, (4, 3, 16, 16), jnp.float32)  # NCHW like torch
    out = jax.block_until_ready(model(x))
    assert out.shape == (4, 10) and out.dtype == jnp.float32
    print("KERNEL_OK")
</pallas_src>

<mosaic_0001>
module attributes {stable_mosaic.version = 11 : i64} {
  func.func @_dense_kernel(%arg0: i32, %arg1: memref<2x16x16x128xbf16, #tpu.memory_space<vmem>>, %arg2: memref<128x128xbf16, #tpu.memory_space<vmem>>, %arg3: memref<1x128xf32, #tpu.memory_space<vmem>>, %arg4: memref<2x16x16x128xbf16, #tpu.memory_space<vmem>>) attributes {dimension_semantics = [#tpu.dimension_semantics<parallel>], iteration_bounds = array<i64: 2>, scalar_prefetch = 0 : i64, scratch_operands = 0 : i64, tpu.core_type = #tpu.core_type<tc>, window_params = [{transform_indices = @transform_0, window_bounds = array<i64: 2, 16, 16, 128>}, {pipeline_mode = #tpu.pipeline_mode<synchronous>, transform_indices = @transform_1, window_bounds = array<i64: 128, 128>}, {pipeline_mode = #tpu.pipeline_mode<synchronous>, transform_indices = @transform_2, window_bounds = array<i64: 1, 128>}, {transform_indices = @transform_3, window_bounds = array<i64: 2, 16, 16, 128>}]} {
    %c0 = arith.constant 0 : index
    %c0_0 = arith.constant 0 : index
    %c0_1 = arith.constant 0 : index
    %c0_2 = arith.constant 0 : index
    %0 = vector.load %arg1[%c0, %c0_0, %c0_1, %c0_2] : memref<2x16x16x128xbf16, #tpu.memory_space<vmem>>, vector<2x16x16x128xbf16>
    %1 = vector.shape_cast %0 : vector<2x16x16x128xbf16> to vector<512x128xbf16>
    %c0_3 = arith.constant 0 : index
    %c0_4 = arith.constant 0 : index
    %2 = vector.load %arg2[%c0_3, %c0_4] : memref<128x128xbf16, #tpu.memory_space<vmem>>, vector<128x128xbf16>
    %cst = arith.constant dense<0.000000e+00> : vector<512x128xf32>
    %3 = tpu.matmul %1, %2, %cst {dimension_numbers = #tpu.dot_dimension_numbers<[1], [0], [0], [1], [0, 0, 1, 1], [], []>} : vector<512x128xbf16>, vector<128x128xbf16>, vector<512x128xf32> -> vector<512x128xf32>
    %c0_5 = arith.constant 0 : index
    %c0_6 = arith.constant 0 : index
    %4 = vector.load %arg3[%c0_5, %c0_6] : memref<1x128xf32, #tpu.memory_space<vmem>>, vector<1x128xf32>
    %5 = vector.broadcast %4 : vector<1x128xf32> to vector<512x128xf32>
    %6 = arith.addf %3, %5 : vector<512x128xf32>
    %cst_7 = arith.constant 0.000000e+00 : f32
    %7 = vector.broadcast %cst_7 : f32 to vector<512x128xf32>
    %8 = arith.maximumf %6, %7 : vector<512x128xf32>
    %9 = vector.shape_cast %8 : vector<512x128xf32> to vector<2x16x16x128xf32>
    %10 = arith.truncf %9 : vector<2x16x16x128xf32> to vector<2x16x16x128xbf16>
    %c0_8 = arith.constant 0 : index
    %c0_9 = arith.constant 0 : index
    %c0_10 = arith.constant 0 : index
    %c0_11 = arith.constant 0 : index
    %11 = vector.load %arg4[%c0_8, %c0_9, %c0_10, %c0_11] : memref<2x16x16x128xbf16, #tpu.memory_space<vmem>>, vector<2x16x16x128xbf16>
    tpu.vector_store %arg4[%c0_8, %c0_9, %c0_10, %c0_11], %10 {strides = array<i32>} : memref<2x16x16x128xbf16, #tpu.memory_space<vmem>>, vector<2x16x16x128xbf16>,
    return
  }
  func.func @transform_0(%arg0: i32) -> (i32, i32, i32, i32) {
    %c0_i32 = arith.constant 0 : i32
    %c0_i32_0 = arith.constant 0 : i32
    %c0_i32_1 = arith.constant 0 : i32
    %c0_i32_2 = arith.constant 0 : i32
    return %arg0, %c0_i32, %c0_i32_0, %c0_i32_1 : i32, i32, i32, i32
  }
  func.func @transform_1(%arg0: i32) -> (i32, i32) {
    %c0_i32 = arith.constant 0 : i32
    %c0_i32_0 = arith.constant 0 : i32
    %c0_i32_1 = arith.constant 0 : i32
    return %c0_i32, %c0_i32_0 : i32, i32
  }
  func.func @transform_2(%arg0: i32) -> (i32, i32) {
    %c0_i32 = arith.constant 0 : i32
    %c0_i32_0 = arith.constant 0 : i32
    %c0_i32_1 = arith.constant 0 : i32
    return %c0_i32, %c0_i32_0 : i32, i32
  }
  func.func @transform_3(%arg0: i32) -> (i32, i32, i32, i32) {
    %c0_i32 = arith.constant 0 : i32
    %c0_i32_0 = arith.constant 0 : i32
    %c0_i32_1 = arith.constant 0 : i32
    %c0_i32_2 = arith.constant 0 : i32
    return %arg0, %c0_i32, %c0_i32_0, %c0_i32_1 : i32, i32, i32, i32
  }
}

</mosaic_0001>

<llo_original>
// kernel: tpu_custom_call.1
$region0: #{tpu_custom_call.1}
  #allocation0 [shape = 'u32[]', space=smem, size = 0x4, offset = 0x4, fixed_abs, tag = 'smem constant byte address 0x4 - core index']
  #allocation1 [shape = 'u32[144,128]{1,0:T(1,128)}', space=vmem, size = 0x12000, scoped, tag = 'internal scratch']
  %s0 = inlined_call_operand.hbm [shape: bf16[4,16,16,128], index: 0, kind: input, shape index: {}]
  %s1 = inlined_call_operand.hbm [shape: bf16[128,128], index: 1, kind: input, shape index: {}]
  %s2 = inlined_call_operand.vmem [shape: f32[1,128], index: 2, kind: input, shape index: {}]
  %s3 = inlined_call_operand.hbm [shape: bf16[4,16,16,128], index: 3, kind: output, shape index: {}]
  %s4 = sld [smem:[#allocation0]]
  $region53: #{tpu_custom_call.1} parent=0
    _
  %s6 = ssub.s32 1, %s4
  %s7 = scalar_select 0, %s6, %s4
  $region1: #{tpu_custom_call.1} parent=0
    #allocation2 [shape = 'u8[262144]{0}', space=vmem, size = 0x40000, scoped, tag = 'input window, operand 0']
    #allocation3 [shape = 's32[2]{0}', space=sflag, size = 0x8, scoped, tag = 'scoped memory for tpu_custom_call.1']
    #allocation4 [shape = 's32[2]{0}', space=sflag, size = 0x8, scoped, tag = 'scoped memory for tpu_custom_call.1']
    #allocation5 [shape = 'u8[32768]{0}', space=vmem, size = 0x8000, scoped, tag = 'input window, operand 1, single buffered']
    #allocation6 [shape = 's32[1]{0}', space=sflag, size = 0x4, scoped, tag = 'scoped memory for tpu_custom_call.1']
    #allocation7 [shape = 'u8[262144]{0}', space=vmem, size = 0x40000, scoped, tag = 'output window, operand 0']
    %8 = vsyncpa [#allocation3], 0
    %s9 = scalar_lea.sflag [#allocation3], 1
    %10 = vsyncpa %s9, 0
    %11 = vsyncpa [#allocation6], 0
    %12 = vsyncpa [#allocation4], 0
    %s13 = scalar_lea.sflag [#allocation4], 1
    %14 = vsyncpa %s13, 0
    loop: start=0, step=1, limit=4
    $region2: #{tpu_custom_call.1} parent=1 // loop_pre_header
      _
    $region3: #{tpu_custom_call.1} parent=1 // loop_header
      %s16 = sphi 0, %s20
      %p17 = scmp.ge.s32.totalorder %s16, 4
      %s26 = sphi 0, %s28
      %s29 = sphi 0, %s26
      %s30 = sphi 0, %s29
      %s46 = sphi 0, %s30
      %s50 = sphi 0, %s50
      %s52 = sphi 0, %s50
      %s53 = sphi 0, %s52
      %s67 = sphi 0, %s53
      %s71 = sphi 0, %s71
      %s73 = sphi 0, %s71
      %s74 = sphi 0, %s73
      %s88 = sphi 0, %s74
      %s94 = sphi 0, %s96
      %s97 = sphi 0, %s94
      %s98 = sphi 0, %s97
      %s114 = sphi 0, %s98
    $region4: #{tpu_custom_call.1} parent=1 // loop_header_branch
      %19 = sbr.rel (%p17) target = $region8
    $region5: #{tpu_custom_call.1} parent=1 // loop_body
      %s21 = ssub.s32 %s16, 1
      %s22 = ssub.s32 %s16, 2
      %s23 = sadd.s32 %s16, 1
      %s24 = ssub.s32 %s16, %s23
      %p25 = scmp.eq.s32.totalorder %s24, 0
      %s27 = sadd.s32 %s26, 1
      %s28 = scalar_select %p25, %s26, %s27
      %p31 = pneg %p25
      %p32 = scmp.eq.s32.totalorder %s16, 1
      %p33 = por %p31, %p32
      %p34 = scmp.ne.s32.totalorder %s26, %s29
      %p35 = scmp.eq.s32.totalorder %s16, 0
      %p36 = por %p34, %p35
      %p37 = scmp.ne.s32.totalorder %s26, %s29
      %p38 = scmp.eq.s32.totalorder %s21, 1
      %p39 = por %p37, %p38
      %p40 = scmp.ne.s32.totalorder %s29, %s30
      %p41 = scmp.eq.s32.totalorder %s21, 0
      %p42 = por %p40, %p41
      %p43 = scmp.ne.s32.totalorder %s29, %s30
      %p44 = scmp.eq.s32.totalorder %s22, 1
      %p45 = por %p43, %p44
      %p47 = scmp.ne.s32.totalorder %s30, %s46
      %p48 = scmp.eq.s32.totalorder %s22, 0
      %p49 = por %p47, %p48
      %s51 = sadd.s32 %s50, 1
      %p54 = scmp.eq.s32.totalorder %s16, 1
      %p55 = scmp.ne.s32.totalorder %s50, %s52
      %p56 = scmp.eq.s32.totalorder %s16, 0
      %p57 = por %p55, %p56
      %p58 = scmp.ne.s32.totalorder %s50, %s52
      %p59 = scmp.eq.s32.totalorder %s21, 1
      %p60 = por %p58, %p59
      %p61 = scmp.ne.s32.totalorder %s52, %s53
      %p62 = scmp.eq.s32.totalorder %s21, 0
      %p63 = por %p61, %p62
      %p64 = scmp.ne.s32.totalorder %s52, %s53
      %p65 = scmp.eq.s32.totalorder %s22, 1
      %p66 = por %p64, %p65
      %p68 = scmp.ne.s32.totalorder %s53, %s67
      %p69 = scmp.eq.s32.totalorder %s22, 0
      %p70 = por %p68, %p69
      %s72 = sadd.s32 %s71, 1
      %p75 = scmp.eq.s32.totalorder %s16, 1
      %p76 = scmp.ne.s32.totalorder %s71, %s73
      %p77 = scmp.eq.s32.totalorder %s16, 0
      %p78 = por %p76, %p77
      %p79 = scmp.ne.s32.totalorder %s71, %s73
      %p80 = scmp.eq.s32.totalorder %s21, 1
      %p81 = por %p79, %p80
      %p82 = scmp.ne.s32.totalorder %s73, %s74
      %p83 = scmp.eq.s32.totalorder %s21, 0
      %p84 = por %p82, %p83
      %p85 = scmp.ne.s32.totalorder %s73, %s74
      %p86 = scmp.eq.s32.totalorder %s22, 1
      %p87 = por %p85, %p86
      %p89 = scmp.ne.s32.totalorder %s74, %s88
      %p90 = scmp.eq.s32.totalorder %s22, 0
      %p91 = por %p89, %p90
      %s92 = ssub.s32 %s16, %s23
      %p93 = scmp.eq.s32.totalorder %s92, 0
      %s95 = sadd.s32 %s94, 1
      %s96 = scalar_select %p93, %s94, %s95
      %p99 = pneg %p93
      %p100 = scmp.eq.s32.totalorder %s16, 1
      %p101 = por %p99, %p100
      %p102 = scmp.ne.s32.totalorder %s94, %s97
      %p103 = scmp.eq.s32.totalorder %s16, 0
      %p104 = por %p102, %p103
      %p105 = scmp.ne.s32.totalorder %s94, %s97
      %p106 = scmp.eq.s32.totalorder %s21, 1
      %p107 = por %p105, %p106
      %p108 = scmp.ne.s32.totalorder %s97, %s98
      %p109 = scmp.eq.s32.totalorder %s21, 0
      %p110 = por %p108, %p109
      %p111 = scmp.ne.s32.totalorder %s97, %s98
      %p112 = scmp.eq.s32.totalorder %s22, 1
      %p113 = por %p111, %p112
      %p115 = scmp.ne.s32.totalorder %s98, %s114
      %p116 = scmp.eq.s32.totalorder %s22, 0
      %p117 = por %p115, %p116
      %p118 = scmp.le.s32.totalorder 1, %s16
      %p119 = scmp.lt.s32.totalorder %s16, 3
      %p120 = pnand %p118, %p119
      %p121 = pneg %p120
      // Predicated region
      $region9: #{tpu_custom_call.1} parent=5 // pred_check
        _
      $region10: #{tpu_custom_call.1} parent=5 // pred_check_branch
        %123 = sbr.rel (%p120) target = $region12
      $region11: #{tpu_custom_call.1} parent=5 // pred_region
        %s124 = ssub.s32 %s16, 1
        // Predicated region
        $region13: #{tpu_custom_call.1} parent=11 // pred_check
          %p125 = pneg %p63
        $region14: #{tpu_custom_call.1} parent=11 // pred_check_branch
          %127 = sbr.rel (%p125) target = $region16
        $region15: #{tpu_custom_call.1} parent=11 // pred_region
          %s129 = ssub.s32 1024, 1024
          %130 = vsyncadd [#allocation6], %s129
          %s131 = sshll.u32 [#allocation5], 4
          %s132 = int_to_ptr.vmem [resolvable:$true] %s131
          %137 = dma.hbm_to_vmem [thread:$0]  %s1, 1024, %s132, [#allocation6], 64, 64, 4
        $region16: #{tpu_custom_call.1} parent=11 // pred_fallthru
          _
        // Predicated region
        $region17: #{tpu_custom_call.1} parent=11 // pred_check
          %p138 = pneg %p84
        $region18: #{tpu_custom_call.1} parent=11 // pred_check_branch
          %140 = sbr.rel (%p138) target = $region20
        $region19: #{tpu_custom_call.1} parent=11 // pred_region
          _
        $region20: #{tpu_custom_call.1} parent=11 // pred_fallthru
          _
      $region12: #{tpu_custom_call.1} parent=5 // pred_fallthru
        _
      %p141 = scmp.lt.s32.totalorder %s16, 2
      // Predicated region
      $region21: #{tpu_custom_call.1} parent=5 // pred_check
        %p142 = pneg %p141
      $region22: #{tpu_custom_call.1} parent=5 // pred_check_branch
        %144 = sbr.rel (%p142) target = $region24
      $region23: #{tpu_custom_call.1} parent=5 // pred_region
        // Predicated region
        $region25: #{tpu_custom_call.1} parent=23 // pred_check
          %p145 = pneg %p36
        $region26: #{tpu_custom_call.1} parent=23 // pred_check_branch
          %147 = sbr.rel (%p145) target = $region28
        $region27: #{tpu_custom_call.1} parent=23 // pred_region
          %s148 = sand.u32 %s26, 1
          %s149 = scalar_lea.sflag [#allocation3], %s148
          %s150 = sand.u32 %s26, 1
          %s151 = smul.addr %s150, 256
          %s152 = scalar_lea.vmem [#allocation2], %s151
          %s153 = smul.u32 2, %s16
          %s155 = ssub.s32 4096, 4096
          %156 = vsyncadd %s149, %s155
          %s157 = smul.addr %s153, 32
          %s158 = smul.addr %s157, 64
          %s159 = scalar_lea.hbm %s0, %s158
          %s160 = sshll.u32 %s152, 4
          %s161 = int_to_ptr.vmem [resolvable:$true] %s160
          %166 = dma.hbm_to_vmem [thread:$0]  %s159, 4096, %s161, %s149, 64, 64, 4
        $region28: #{tpu_custom_call.1} parent=23 // pred_fallthru
          _
      $region24: #{tpu_custom_call.1} parent=5 // pred_fallthru
        _
      %p167 = scmp.le.s32.totalorder 1, %s16
      %p168 = scmp.lt.s32.totalorder %s16, 3
      %p169 = pnand %p167, %p168
      %p170 = pneg %p169
      // Predicated region
      $region29: #{tpu_custom_call.1} parent=5 // pred_check
        _
      $region30: #{tpu_custom_call.1} parent=5 // pred_check_branch
        %172 = sbr.rel (%p169) target = $region32
      $region31: #{tpu_custom_call.1} parent=5 // pred_region
        %s173 = ssub.s32 %s16, 1
        %s174 = sand.u32 %s29, 1
        %s175 = scalar_lea.sflag [#allocation3], %s174
        %s176 = sand.u32 %s29, 1
        %s177 = smul.addr %s176, 256
        %s178 = scalar_lea.vmem [#allocation2], %s177
        // Predicated region
        $region33: #{tpu_custom_call.1} parent=31 // pred_check
          %p179 = pneg %p42
        $region34: #{tpu_custom_call.1} parent=31 // pred_check_branch
          %181 = sbr.rel (%p179) target = $region36
        $region35: #{tpu_custom_call.1} parent=31 // pred_region
          %182 = dma.done %s175, 4096
        $region36: #{tpu_custom_call.1} parent=31 // pred_fallthru
          _
        // Predicated region
        $region37: #{tpu_custom_call.1} parent=31 // pred_check
          %p183 = pneg %p63
        $region38: #{tpu_custom_call.1} parent=31 // pred_check_branch
          %185 = sbr.rel (%p183) target = $region40
        $region39: #{tpu_custom_call.1} parent=31 // pred_region
          %186 = dma.done [#allocation6], 1024
        $region40: #{tpu_custom_call.1} parent=31 // pred_fallthru
          _
        %s187 = sand.u32 %s29, 1
        %s188 = scalar_lea.sflag [#allocation3], %s187
        %s189 = sand.u32 %s29, 1
        %s190 = smul.addr %s189, 256
        %s191 = scalar_lea.vmem [#allocation2], %s190
        %p192 = pneg %p42
        %p193 = pneg %p39
        %p194 = pneg %p63
        %p195 = pneg %p60
        %p196 = pneg %p84
        %p197 = pneg %p81
        %p198 = pneg %p110
        %p199 = pneg %p107
        %s200 = sand.u32 %s97, 1
        %s201 = scalar_lea.sflag [#allocation4], %s200
        %s202 = sand.u32 %s97, 1
        %s203 = smul.addr %s202, 256
        %s204 = scalar_lea.vmem [#allocation7], %s203
        %s205 = smul.u32 2, %s21
        %s206 = smul.u32 2, %s21
        %v208 = vld [vmem:[%s178] sm:$0xf]
        %v209 = vld [vmem:[%s178 + $0x4] sm:$0xf]
        %v210 = vld [vmem:[%s178 + $0x8] sm:$0xf]
        %v211 = vld [vmem:[%s178 + $0xc] sm:$0xf]
        %v212 = vld [vmem:[%s178 + $0x10] sm:$0xf]
        %v213 = vld [vmem:[%s178 + $0x14] sm:$0xf]
        %v214 = vld [vmem:[%s178 + $0x18] sm:$0xf]
        %v215 = vld [vmem:[%s178 + $0x1c] sm:$0xf]
        %v216 = vld [vmem:[%s178 + $0x20] sm:$0xf]
        %v217 = vld [vmem:[%s178 + $0x24] sm:$0xf]
        %v218 = vld [vmem:[%s178 + $0x28] sm:$0xf]
        %v219 = vld [vmem:[%s178 + $0x2c] sm:$0xf]
        %v220 = vld [vmem:[%s178 + $0x30] sm:$0xf]
        %v221 = vld [vmem:[%s178 + $0x34] sm:$0xf]
        %v222 = vld [vmem:[%s178 + $0x38] sm:$0xf]
        %v223 = vld [vmem:[%s178 + $0x3c] sm:$0xf]
        %v224 = vld [vmem:[%s178 + $0x40] sm:$0xf]
        %v225 = vld [vmem:[%s178 + $0x44] sm:$0xf]
        %v226 = vld [vmem:[%s178 + $0x48] sm:$0xf]
        %v227 = vld [vmem:[%s178 + $0x4c] sm:$0xf]
        %v228 = vld [vmem:[%s178 + $0x50] sm:$0xf]
        %v229 = vld [vmem:[%s178 + $0x54] sm:$0xf]
        %v230 = vld [vmem:[%s178 + $0x58] sm:$0xf]
        %v231 = vld [vmem:[%s178 + $0x5c] sm:$0xf]
        %v232 = vld [vmem:[%s178 + $0x60] sm:$0xf]
        %v233 = vld [vmem:[%s178 + $0x64] sm:$0xf]
        %v234 = vld [vmem:[%s178 + $0x68] sm:$0xf]
        %v235 = vld [vmem:[%s178 + $0x6c] sm:$0xf]
        %v236 = vld [vmem:[%s178 + $0x70] sm:$0xf]
        %v237 = vld [vmem:[%s178 + $0x74] sm:$0xf]
        %v238 = vld [vmem:[%s178 + $0x78] sm:$0xf]
        %v239 = vld [vmem:[%s178 + $0x7c] sm:$0xf]
        %v240 = vld [vmem:[%s178 + $0x80] sm:$0xf]
        %v241 = vld [vmem:[%s178 + $0x84] sm:$0xf]
        %v242 = vld [vmem:[%s178 + $0x88] sm:$0xf]
        %v243 = vld [vmem:[%s178 + $0x8c] sm:$0xf]
        %v244 = vld [vmem:[%s178 + $0x90] sm:$0xf]
        %v245 = vld [vmem:[%s178 + $0x94] sm:$0xf]
        %v246 = vld [vmem:[%s178 + $0x98] sm:$0xf]
        %v247 = vld [vmem:[%s178 + $0x9c] sm:$0xf]
        %v248 = vld [vmem:[%s178 + $0xa0] sm:$0xf]
        %v249 = vld [vmem:[%s178 + $0xa4] sm:$0xf]
        %v250 = vld [vmem:[%s178 + $0xa8] sm:$0xf]
        %v251 = vld [vmem:[%s178 + $0xac] sm:$0xf]
        %v252 = vld [vmem:[%s178 + $0xb0] sm:$0xf]
        %v253 = vld [vmem:[%s178 + $0xb4] sm:$0xf]
        %v254 = vld [vmem:[%s178 + $0xb8] sm:$0xf]
        %v255 = vld [vmem:[%s178 + $0xbc] sm:$0xf]
        %v256 = vld [vmem:[%s178 + $0xc0] sm:$0xf]
        %v257 = vld [vmem:[%s178 + $0xc4] sm:$0xf]
        %v258 = vld [vmem:[%s178 + $0xc8] sm:$0xf]
        %v259 = vld [vmem:[%s178 + $0xcc] sm:$0xf]
        %v260 = vld [vmem:[%s178 + $0xd0] sm:$0xf]
        %v261 = vld [vmem:[%s178 + $0xd4] sm:$0xf]
        %v262 = vld [vmem:[%s178 + $0xd8] sm:$0xf]
        %v263 = vld [vmem:[%s178 + $0xdc] sm:$0xf]
        %v264 = vld [vmem:[%s178 + $0xe0] sm:$0xf]
        %v265 = vld [vmem:[%s178 + $0xe4] sm:$0xf]
        %v266 = vld [vmem:[%s178 + $0xe8] sm:$0xf]
        %v267 = vld [vmem:[%s178 + $0xec] sm:$0xf]
        %v268 = vld [vmem:[%s178 + $0xf0] sm:$0xf]
        %v269 = vld [vmem:[%s178 + $0xf4] sm:$0xf]
        %v270 = vld [vmem:[%s178 + $0xf8] sm:$0xf]
        %v271 = vld [vmem:[%s178 + $0xfc] sm:$0xf]
        %v272 = vld [vmem:[#allocation5] sm:$0xf]
        %v273 = vld [vmem:[#allocation5 + $0x4] sm:$0xf]
        %v274 = vld [vmem:[#allocation5 + $0x8] sm:$0xf]
        %v275 = vld [vmem:[#allocation5 + $0xc] sm:$0xf]
        %v276 = vld [vmem:[#allocation5 + $0x10] sm:$0xf]
        %v277 = vld [vmem:[#allocation5 + $0x14] sm:$0xf]
        %v278 = vld [vmem:[#allocation5 + $0x18] sm:$0xf]
        %v279 = vld [vmem:[#allocation5 + $0x1c] sm:$0xf]
        %v280 = vld [vmem:[#allocation5 + $0x20] sm:$0xf]
        %v281 = vld [vmem:[#allocation5 + $0x24] sm:$0xf]
        %v282 = vld [vmem:[#allocation5 + $0x28] sm:$0xf]
        %v283 = vld [vmem:[#allocation5 + $0x2c] sm:$0xf]
        %v284 = vld [vmem:[#allocation5 + $0x30] sm:$0xf]
        %v285 = vld [vmem:[#allocation5 + $0x34] sm:$0xf]
        %v286 = vld [vmem:[#allocation5 + $0x38] sm:$0xf]
        %v287 = vld [vmem:[#allocation5 + $0x3c] sm:$0xf]
        %v288 = vld [vmem:[%s2] sm:$0x1]
        %v290 = vlaneseq
        %v291 = vshrl.u32 %v290, 7
        %v292 = vsub.s32 0, %v291
        %v293 = vrot.slane %v288, %v292
        %v359 = vunpack.c.l.b16 %v208
        %v360 = vunpack.c.l.b16 %v209
        %v361 = vunpack.c.l.b16 %v210
        %v362 = vunpack.c.l.b16 %v211
        %v363 = vunpack.c.l.b16 %v212
        %v364 = vunpack.c.l.b16 %v213
        %v365 = vunpack.c.l.b16 %v214
        %v366 = vunpack.c.l.b16 %v215
        %v367 = vunpack.c.l.b16 %v216
        %v368 = vunpack.c.l.b16 %v217
        %v369 = vunpack.c.l.b16 %v218
        %v370 = vunpack.c.l.b16 %v219
        %v371 = vunpack.c.l.b16 %v220
        %v372 = vunpack.c.l.b16 %v221
        %v373 = vunpack.c.l.b16 %v222
        %v374 = vunpack.c.l.b16 %v223
        %v375 = vunpack.c.l.b16 %v224
        %v376 = vunpack.c.l.b16 %v225
        %v377 = vunpack.c.l.b16 %v226
        %v378 = vunpack.c.l.b16 %v227
        %v379 = vunpack.c.l.b16 %v228
        %v380 = vunpack.c.l.b16 %v229
        %v381 = vunpack.c.l.b16 %v230
        %v382 = vunpack.c.l.b16 %v231
        %v383 = vunpack.c.l.b16 %v232
        %v384 = vunpack.c.l.b16 %v233
        %v385 = vunpack.c.l.b16 %v234
        %v386 = vunpack.c.l.b16 %v235
        %v387 = vunpack.c.l.b16 %v236
        %v388 = vunpack.c.l.b16 %v237
        %v389 = vunpack.c.l.b16 %v238
        %v390 = vunpack.c.l.b16 %v239
        %v391 = vunpack.c.l.b16 %v240
        %v392 = vunpack.c.l.b16 %v241
        %v393 = vunpack.c.l.b16 %v242
        %v394 = vunpack.c.l.b16 %v243
        %v395 = vunpack.c.l.b16 %v244
        %v396 = vunpack.c.l.b16 %v245
        %v397 = vunpack.c.l.b16 %v246
        %v398 = vunpack.c.l.b16 %v247
        %v399 = vunpack.c.l.b16 %v248
        %v400 = vunpack.c.l.b16 %v249
        %v401 = vunpack.c.l.b16 %v250
        %v402 = vunpack.c.l.b16 %v251
        %v403 = vunpack.c.l.b16 %v252
        %v404 = vunpack.c.l.b16 %v253
        %v405 = vunpack.c.l.b16 %v254
        %v406 = vunpack.c.l.b16 %v255
        %v407 = vunpack.c.l.b16 %v256
        %v408 = vunpack.c.l.b16 %v257
        %v409 = vunpack.c.l.b16 %v258
        %v410 = vunpack.c.l.b16 %v259
        %v411 = vunpack.c.l.b16 %v260
        %v412 = vunpack.c.l.b16 %v261
        %v413 = vunpack.c.l.b16 %v262
        %v414 = vunpack.c.l.b16 %v263
        %v415 = vunpack.c.l.b16 %v264
        %v416 = vunpack.c.l.b16 %v265
        %v417 = vunpack.c.l.b16 %v266
        %v418 = vunpack.c.l.b16 %v267
        %v419 = vunpack.c.l.b16 %v268
        %v420 = vunpack.c.l.b16 %v269
        %v421 = vunpack.c.l.b16 %v270
        %v422 = vunpack.c.l.b16 %v271
        %v423 = vpack.c.b16 %v360, %v359
        %v424 = vpack.c.b16 %v362, %v361
        %v425 = vpack.c.b16 %v364, %v363
        %v426 = vpack.c.b16 %v366, %v365
        %v427 = vpack.c.b16 %v368, %v367
        %v428 = vpack.c.b16 %v370, %v369
        %v429 = vpack.c.b16 %v372, %v371
        %v430 = vpack.c.b16 %v374, %v373
        %v431 = vpack.c.b16 %v376, %v375
        %v432 = vpack.c.b16 %v378, %v377
        %v433 = vpack.c.b16 %v380, %v379
        %v434 = vpack.c.b16 %v382, %v381
        %v435 = vpack.c.b16 %v384, %v383
        %v436 = vpack.c.b16 %v386, %v385
        %v437 = vpack.c.b16 %v388, %v387
        %v438 = vpack.c.b16 %v390, %v389
        %v439 = vpack.c.b16 %v392, %v391
        %v440 = vpack.c.b16 %v394, %v393
        %v441 = vpack.c.b16 %v396, %v395
        %v442 = vpack.c.b16 %v398, %v397
        %v443 = vpack.c.b16 %v400, %v399
        %v444 = vpack.c.b16 %v402, %v401
        %v445 = vpack.c.b16 %v404, %v403
        %v446 = vpack.c.b16 %v406, %v405
        %v447 = vpack.c.b16 %v408, %v407
        %v448 = vpack.c.b16 %v410, %v409
        %v449 = vpack.c.b16 %v412, %v411
        %v450 = vpack.c.b16 %v414, %v413
        %v451 = vpack.c.b16 %v416, %v415
        %v452 = vpack.c.b16 %v418, %v417
        %v453 = vpack.c.b16 %v420, %v419
        %v454 = vpack.c.b16 %v422, %v421
        %v503 = vunpack.c.l.b16 %v272
        %v504 = vunpack.c.l.b16 %v273
        %v505 = vunpack.c.l.b16 %v274
        %v506 = vunpack.c.l.b16 %v275
        %v507 = vunpack.c.l.b16 %v276
        %v508 = vunpack.c.l.b16 %v277
        %v509 = vunpack.c.l.b16 %v278
        %v510 = vunpack.c.l.b16 %v279
        %v511 = vunpack.c.l.b16 %v280
        %v512 = vunpack.c.l.b16 %v281
        %v513 = vunpack.c.l.b16 %v282
        %v514 = vunpack.c.l.b16 %v283
        %v515 = vunpack.c.l.b16 %v284
        %v516 = vunpack.c.l.b16 %v285
        %v517 = vunpack.c.l.b16 %v286
        %v518 = vunpack.c.l.b16 %v287
        %v519 = vpack.c.b16 %v504, %v503
        %v520 = vpack.c.b16 %v506, %v505
        %v521 = vpack.c.b16 %v508, %v507
        %v522 = vpack.c.b16 %v510, %v509
        %v523 = vpack.c.b16 %v512, %v511
        %v524 = vpack.c.b16 %v514, %v513
        %v525 = vpack.c.b16 %v516, %v515
        %v526 = vpack.c.b16 %v518, %v517
        %535 = vmatprep.subr.bf16.mxu0 0
        %536 = vmatpush1.bf16.msra.mxu0 %v526
        %537 = vmatprep.subr.bf16.mxu0 0
        %538 = vmatpush1.bf16.msra.mxu0 %v525
        %539 = vmatprep.subr.bf16.mxu0 0
        %540 = vmatpush1.bf16.msra.mxu0 %v524
        %541 = vmatprep.subr.bf16.mxu0 0
        %542 = vmatpush1.bf16.msra.mxu0 %v523
        %543 = vmatprep.subr.bf16.mxu0 0
        %544 = vmatpush1.bf16.msra.mxu0 %v522
        %545 = vmatprep.subr.bf16.mxu0 0
        %546 = vmatpush1.bf16.msra.mxu0 %v521
        %547 = vmatprep.subr.bf16.mxu0 0
        %548 = vmatpush1.bf16.msra.mxu0 %v520
        %549 = vmatprep.subr.bf16.mxu0 0
        %550 = vmatpush1.bf16.msra.mxu0 %v519
        %551 = vmatprep.subr.bf16.mxu0 0
        %552 = vmatpush2.bf16.msra.mxu0 0
        %553 = vmatprep.subr.bf16.mxu0 0
        %554 = vmatpush2.bf16.msra.mxu0 0
        %555 = vmatprep.subr.bf16.mxu0 0
        %556 = vmatpush2.bf16.msra.mxu0 0
        %557 = vmatprep.subr.bf16.mxu0 0
        %558 = vmatpush2.bf16.msra.mxu0 0
        %559 = vmatprep.subr.bf16.mxu0 0
        %560 = vmatpush2.bf16.msra.mxu0 0
        %561 = vmatprep.subr.bf16.mxu0 0
        %562 = vmatpush2.bf16.msra.mxu0 0
        %563 = vmatprep.subr.bf16.mxu0 0
        %564 = vmatpush2.bf16.msra.mxu0 0
        %565 = vmatprep.subr.bf16.mxu0 0
        %566 = vmatpush2.bf16.msra.mxu0 0
        %567 = vmatprep.mubr.bf16.mxu0 0
        %568 = vmatmul.mubr.bf16.gmra.mxu0 %v423
        %v569 = vpop.f32.mrf.mxu0
        %v570 = vadd.f32 %v293, %v569
        %v571 = vpop.f32.mrf.mxu0
        %v572 = vpop.f32.mrf.mxu0
        %v573 = vadd.f32 %v293, %v572
        %v574 = vpop.f32.mrf.mxu0
        %575 = vmatprep.mubr.bf16.mxu0 0
        %576 = vmatmul.mubr.bf16.gmra.mxu0 %v424
        %v577 = vpop.f32.mrf.mxu0
        %v578 = vadd.f32 %v293, %v577
        %v579 = vpop.f32.mrf.mxu0
        %v580 = vpop.f32.mrf.mxu0
        %v581 = vadd.f32 %v293, %v580
        %v582 = vpop.f32.mrf.mxu0
        %583 = vmatprep.mubr.bf16.mxu0 0
        %584 = vmatmul.mubr.bf16.gmra.mxu0 %v425
        %v585 = vpop.f32.mrf.mxu0
        %v586 = vadd.f32 %v293, %v585
        %v587 = vpop.f32.mrf.mxu0
        %v588 = vpop.f32.mrf.mxu0
        %v589 = vadd.f32 %v293, %v588
        %v590 = vpop.f32.mrf.mxu0
        %591 = vmatprep.mubr.bf16.mxu0 0
        %592 = vmatmul.mubr.bf16.gmra.mxu0 %v426
        %v593 = vpop.f32.mrf.mxu0
        %v594 = vadd.f32 %v293, %v593
        %v595 = vpop.f32.mrf.mxu0
        %v596 = vpop.f32.mrf.mxu0
        %v597 = vadd.f32 %v293, %v596
        %v598 = vpop.f32.mrf.mxu0
        %599 = vmatprep.mubr.bf16.mxu0 0
        %600 = vmatmul.mubr.bf16.gmra.mxu0 %v427
        %v601 = vpop.f32.mrf.mxu0
        %v602 = vadd.f32 %v293, %v601
        %v603 = vpop.f32.mrf.mxu0
        %v604 = vpop.f32.mrf.mxu0
        %v605 = vadd.f32 %v293, %v604
        %v606 = vpop.f32.mrf.mxu0
        %607 = vmatprep.mubr.bf16.mxu0 0
        %608 = vmatmul.mubr.bf16.gmra.mxu0 %v428
        %v609 = vpop.f32.mrf.mxu0
        %v610 = vadd.f32 %v293, %v609
        %v611 = vpop.f32.mrf.mxu0
        %v612 = vpop.f32.mrf.mxu0
        %v613 = vadd.f32 %v293, %v612
        %v614 = vpop.f32.mrf.mxu0
        %615 = vmatprep.mubr.bf16.mxu0 0
        %616 = vmatmul.mubr.bf16.gmra.mxu0 %v429
        %v617 = vpop.f32.mrf.mxu0
        %v618 = vadd.f32 %v293, %v617
        %v619 = vpop.f32.mrf.mxu0
        %v620 = vpop.f32.mrf.mxu0
        %v621 = vadd.f32 %v293, %v620
        %v622 = vpop.f32.mrf.mxu0
        %623 = vmatprep.mubr.bf16.mxu0 0
        %624 = vmatmul.mubr.bf16.gmra.mxu0 %v430
        %v625 = vpop.f32.mrf.mxu0
        %v626 = vadd.f32 %v293, %v625
        %v627 = vpop.f32.mrf.mxu0
        %v628 = vpop.f32.mrf.mxu0
        %v629 = vadd.f32 %v293, %v628
        %v630 = vpop.f32.mrf.mxu0
        %631 = vmatprep.mubr.bf16.mxu0 0
        %632 = vmatmul.mubr.bf16.gmra.mxu0 %v431
        %v633 = vpop.f32.mrf.mxu0
        %v634 = vadd.f32 %v293, %v633
        %v635 = vpop.f32.mrf.mxu0
        %v636 = vpop.f32.mrf.mxu0
        %v637 = vadd.f32 %v293, %v636
        %v638 = vpop.f32.mrf.mxu0
        %639 = vmatprep.mubr.bf16.mxu0 0
        %640 = vmatmul.mubr.bf16.gmra.mxu0 %v432
        %v641 = vpop.f32.mrf.mxu0
        %v642 = vadd.f32 %v293, %v641
        %v643 = vpop.f32.mrf.mxu0
        %v644 = vpop.f32.mrf.mxu0
        %v645 = vadd.f32 %v293, %v644
        %v646 = vpop.f32.mrf.mxu0
        %647 = vmatprep.mubr.bf16.mxu0 0
        %648 = vmatmul.mubr.bf16.gmra.mxu0 %v433
        %v649 = vpop.f32.mrf.mxu0
        %v650 = vadd.f32 %v293, %v649
        %v651 = vpop.f32.mrf.mxu0
        %v652 = vpop.f32.mrf.mxu0
        %v653 = vadd.f32 %v293, %v652
        %v654 = vpop.f32.mrf.mxu0
        %655 = vmatprep.mubr.bf16.mxu0 0
        %656 = vmatmul.mubr.bf16.gmra.mxu0 %v434
        %v657 = vpop.f32.mrf.mxu0
        %v658 = vadd.f32 %v293, %v657
        %v659 = vpop.f32.mrf.mxu0
        %v660 = vpop.f32.mrf.mxu0
        %v661 = vadd.f32 %v293, %v660
        %v662 = vpop.f32.mrf.mxu0
        %663 = vmatprep.mubr.bf16.mxu0 0
        %664 = vmatmul.mubr.bf16.gmra.mxu0 %v435
        %v665 = vpop.f32.mrf.mxu0
        %v666 = vadd.f32 %v293, %v665
        %v667 = vpop.f32.mrf.mxu0
        %v668 = vpop.f32.mrf.mxu0
        %v669 = vadd.f32 %v293, %v668
        %v670 = vpop.f32.mrf.mxu0
        %671 = vmatprep.mubr.bf16.mxu0 0
        %672 = vmatmul.mubr.bf16.gmra.mxu0 %v436
        %v673 = vpop.f32.mrf.mxu0
        %v674 = vadd.f32 %v293, %v673
        %v675 = vpop.f32.mrf.mxu0
        %v676 = vpop.f32.mrf.mxu0
        %v677 = vadd.f32 %v293, %v676
        %v678 = vpop.f32.mrf.mxu0
        %679 = vmatprep.mubr.bf16.mxu0 0
        %680 = vmatmul.mubr.bf16.gmra.mxu0 %v437
        %v681 = vpop.f32.mrf.mxu0
        %v682 = vadd.f32 %v293, %v681
        %v683 = vpop.f32.mrf.mxu0
        %v684 = vpop.f32.mrf.mxu0
        %v685 = vadd.f32 %v293, %v684
        %v686 = vpop.f32.mrf.mxu0
        %687 = vmatprep.mubr.bf16.mxu0 0
        %688 = vmatmul.mubr.bf16.gmra.mxu0 %v438
        %v689 = vpop.f32.mrf.mxu0
        %v690 = vadd.f32 %v293, %v689
        %v691 = vpop.f32.mrf.mxu0
        %v692 = vpop.f32.mrf.mxu0
        %v693 = vadd.f32 %v293, %v692
        %v694 = vpop.f32.mrf.mxu0
        %695 = vmatprep.mubr.bf16.mxu0 0
        %696 = vmatmul.mubr.bf16.gmra.mxu0 %v439
        %v697 = vpop.f32.mrf.mxu0
        %v698 = vadd.f32 %v293, %v697
        %v699 = vpop.f32.mrf.mxu0
        %v700 = vpop.f32.mrf.mxu0
        %v701 = vadd.f32 %v293, %v700
        %v702 = vpop.f32.mrf.mxu0
        %703 = vmatprep.mubr.bf16.mxu0 0
        %704 = vmatmul.mubr.bf16.gmra.mxu0 %v440
        %v705 = vpop.f32.mrf.mxu0
        %v706 = vadd.f32 %v293, %v705
        %v707 = vpop.f32.mrf.mxu0
        %v708 = vpop.f32.mrf.mxu0
        %v709 = vadd.f32 %v293, %v708
        %v710 = vpop.f32.mrf.mxu0
        %711 = vmatprep.mubr.bf16.mxu0 0
        %712 = vmatmul.mubr.bf16.gmra.mxu0 %v441
        %v713 = vpop.f32.mrf.mxu0
        %v714 = vadd.f32 %v293, %v713
        %v715 = vpop.f32.mrf.mxu0
        %v716 = vpop.f32.mrf.mxu0
        %v717 = vadd.f32 %v293, %v716
        %v718 = vpop.f32.mrf.mxu0
        %719 = vmatprep.mubr.bf16.mxu0 0
        %720 = vmatmul.mubr.bf16.gmra.mxu0 %v442
        %v721 = vpop.f32.mrf.mxu0
        %v722 = vadd.f32 %v293, %v721
        %v723 = vpop.f32.mrf.mxu0
        %v724 = vpop.f32.mrf.mxu0
        %v725 = vadd.f32 %v293, %v724
        %v726 = vpop.f32.mrf.mxu0
        %727 = vmatprep.mubr.bf16.mxu0 0
        %728 = vmatmul.mubr.bf16.gmra.mxu0 %v443
        %v729 = vpop.f32.mrf.mxu0
        %v730 = vadd.f32 %v293, %v729
        %v731 = vpop.f32.mrf.mxu0
        %v732 = vpop.f32.mrf.mxu0
        %v733 = vadd.f32 %v293, %v732
        %v734 = vpop.f32.mrf.mxu0
        %735 = vmatprep.mubr.bf16.mxu0 0
        %736 = vmatmul.mubr.bf16.gmra.mxu0 %v444
        %v737 = vpop.f32.mrf.mxu0
        %v738 = vadd.f32 %v293, %v737
        %v739 = vpop.f32.mrf.mxu0
        %v740 = vpop.f32.mrf.mxu0
        %v741 = vadd.f32 %v293, %v740
        %v742 = vpop.f32.mrf.mxu0
        %743 = vmatprep.mubr.bf16.mxu0 0
        %744 = vmatmul.mubr.bf16.gmra.mxu0 %v445
        %v745 = vpop.f32.mrf.mxu0
        %v746 = vadd.f32 %v293, %v745
        %v747 = vpop.f32.mrf.mxu0
        %v748 = vpop.f32.mrf.mxu0
        %v749 = vadd.f32 %v293, %v748
        %v750 = vpop.f32.mrf.mxu0
        %751 = vmatprep.mubr.bf16.mxu0 0
        %752 = vmatmul.mubr.bf16.gmra.mxu0 %v446
        %v753 = vpop.f32.mrf.mxu0
        %v754 = vadd.f32 %v293, %v753
        %v755 = vpop.f32.mrf.mxu0
        %v756 = vpop.f32.mrf.mxu0
        %v757 = vadd.f32 %v293, %v756
        %v758 = vpop.f32.mrf.mxu0
        %759 = vmatprep.mubr.bf16.mxu0 0
        %760 = vmatmul.mubr.bf16.gmra.mxu0 %v447
        %v761 = vpop.f32.mrf.mxu0
        %v762 = vadd.f32 %v293, %v761
        %v763 = vpop.f32.mrf.mxu0
        %v764 = vpop.f32.mrf.mxu0
        %v765 = vadd.f32 %v293, %v764
        %v766 = vpop.f32.mrf.mxu0
        %767 = vmatprep.mubr.bf16.mxu0 0
        %768 = vmatmul.mubr.bf16.gmra.mxu0 %v448
        %v769 = vpop.f32.mrf.mxu0
        %v770 = vadd.f32 %v293, %v769
        %v771 = vpop.f32.mrf.mxu0
        %v772 = vpop.f32.mrf.mxu0
        %v773 = vadd.f32 %v293, %v772
        %v774 = vpop.f32.mrf.mxu0
        %775 = vmatprep.mubr.bf16.mxu0 0
        %776 = vmatmul.mubr.bf16.gmra.mxu0 %v449
        %v777 = vpop.f32.mrf.mxu0
        %v778 = vadd.f32 %v293, %v777
        %v779 = vpop.f32.mrf.mxu0
        %v780 = vpop.f32.mrf.mxu0
        %v781 = vadd.f32 %v293, %v780
        %v782 = vpop.f32.mrf.mxu0
        %783 = vmatprep.mubr.bf16.mxu0 0
        %784 = vmatmul.mubr.bf16.gmra.mxu0 %v450
        %v785 = vpop.f32.mrf.mxu0
        %v786 = vadd.f32 %v293, %v785
        %v787 = vpop.f32.mrf.mxu0
        %v788 = vpop.f32.mrf.mxu0
        %v789 = vadd.f32 %v293, %v788
        %v790 = vpop.f32.mrf.mxu0
        %791 = vmatprep.mubr.bf16.mxu0 0
        %792 = vmatmul.mubr.bf16.gmra.mxu0 %v451
        %v793 = vpop.f32.mrf.mxu0
        %v794 = vadd.f32 %v293, %v793
        %v795 = vpop.f32.mrf.mxu0
        %v796 = vpop.f32.mrf.mxu0
        %v797 = vadd.f32 %v293, %v796
        %v798 = vpop.f32.mrf.mxu0
        %799 = vmatprep.mubr.bf16.mxu0 0
        %800 = vmatmul.mubr.bf16.gmra.mxu0 %v452
        %v801 = vpop.f32.mrf.mxu0
        %v802 = vadd.f32 %v293, %v801
        %v803 = vpop.f32.mrf.mxu0
        %v804 = vpop.f32.mrf.mxu0
        %v805 = vadd.f32 %v293, %v804
        %v806 = vpop.f32.mrf.mxu0
        %807 = vmatprep.mubr.bf16.mxu0 0
        %808 = vmatmul.mubr.bf16.gmra.mxu0 %v453
        %v809 = vpop.f32.mrf.mxu0
        %v810 = vadd.f32 %v293, %v809
        %v811 = vpop.f32.mrf.mxu0
        %v812 = vpop.f32.mrf.mxu0
        %v813 = vadd.f32 %v293, %v812
        %v814 = vpop.f32.mrf.mxu0
        %815 = vmatprep.mubr.bf16.mxu0 0
        %816 = vmatmul.mubr.bf16.gmra.mxu0 %v454
        %v817 = vpop.f32.mrf.mxu0
        %v818 = vadd.f32 %v293, %v817
        %v819 = vpop.f32.mrf.mxu0
        %v820 = vpop.f32.mrf.mxu0
        %v821 = vadd.f32 %v293, %v820
        %v822 = vpop.f32.mrf.mxu0
        %823 = vdwg.mxu0
        %v824 = vmax.f32 %v570, 0.0
        %v825 = vmax.f32 %v573, 0.0
        %v826 = vmax.f32 %v578, 0.0
        %v827 = vmax.f32 %v581, 0.0
        %v828 = vmax.f32 %v586, 0.0
        %v829 = vmax.f32 %v589, 0.0
        %v830 = vmax.f32 %v594, 0.0
        %v831 = vmax.f32 %v597, 0.0
        %v832 = vmax.f32 %v602, 0.0
        %v833 = vmax.f32 %v605, 0.0
        %v834 = vmax.f32 %v610, 0.0
        %v835 = vmax.f32 %v613, 0.0
        %v836 = vmax.f32 %v618, 0.0
        %v837 = vmax.f32 %v621, 0.0
        %v838 = vmax.f32 %v626, 0.0
        %v839 = vmax.f32 %v629, 0.0
        %v840 = vmax.f32 %v634, 0.0
        %v841 = vmax.f32 %v637, 0.0
        %v842 = vmax.f32 %v642, 0.0
        %v843 = vmax.f32 %v645, 0.0
        %v844 = vmax.f32 %v650, 0.0
        %v845 = vmax.f32 %v653, 0.0
        %v846 = vmax.f32 %v658, 0.0
        %v847 = vmax.f32 %v661, 0.0
        %v848 = vmax.f32 %v666, 0.0
        %v849 = vmax.f32 %v669, 0.0
        %v850 = vmax.f32 %v674, 0.0
        %v851 = vmax.f32 %v677, 0.0
        %v852 = vmax.f32 %v682, 0.0
        %v853 = vmax.f32 %v685, 0.0
        %v854 = vmax.f32 %v690, 0.0
        %v855 = vmax.f32 %v693, 0.0
        %v856 = vmax.f32 %v698, 0.0
        %v857 = vmax.f32 %v701, 0.0
        %v858 = vmax.f32 %v706, 0.0
        %v859 = vmax.f32 %v709, 0.0
        %v860 = vmax.f32 %v714, 0.0
        %v861 = vmax.f32 %v717, 0.0
        %v862 = vmax.f32 %v722, 0.0
        %v863 = vmax.f32 %v725, 0.0
        %v864 = vmax.f32 %v730, 0.0
        %v865 = vmax.f32 %v733, 0.0
        %v866 = vmax.f32 %v738, 0.0
        %v867 = vmax.f32 %v741, 0.0
        %v868 = vmax.f32 %v746, 0.0
        %v869 = vmax.f32 %v749, 0.0
        %v870 = vmax.f32 %v754, 0.0
        %v871 = vmax.f32 %v757, 0.0
        %v872 = vmax.f32 %v762, 0.0
        %v873 = vmax.f32 %v765, 0.0
        %v874 = vmax.f32 %v770, 0.0
        %v875 = vmax.f32 %v773, 0.0
        %v876 = vmax.f32 %v778, 0.0
        %v877 = vmax.f32 %v781, 0.0
        %v878 = vmax.f32 %v786, 0.0
        %v879 = vmax.f32 %v789, 0.0
        %v880 = vmax.f32 %v794, 0.0
        %v881 = vmax.f32 %v797, 0.0
        %v882 = vmax.f32 %v802, 0.0
        %v883 = vmax.f32 %v805, 0.0
        %v884 = vmax.f32 %v810, 0.0
        %v885 = vmax.f32 %v813, 0.0
        %v886 = vmax.f32 %v818, 0.0
        %v887 = vmax.f32 %v821, 0.0
        %v888 = vpack.c.bf16 %v825, %v824
        %v889 = vpack.c.bf16 %v827, %v826
        %v890 = vpack.c.bf16 %v829, %v828
        %v891 = vpack.c.bf16 %v831, %v830
        %v892 = vpack.c.bf16 %v833, %v832
        %v893 = vpack.c.bf16 %v835, %v834
        %v894 = vpack.c.bf16 %v837, %v836
        %v895 = vpack.c.bf16 %v839, %v838
        %v896 = vpack.c.bf16 %v841, %v840
        %v897 = vpack.c.bf16 %v843, %v842
        %v898 = vpack.c.bf16 %v845, %v844
        %v899 = vpack.c.bf16 %v847, %v846
        %v900 = vpack.c.bf16 %v849, %v848
        %v901 = vpack.c.bf16 %v851, %v850
        %v902 = vpack.c.bf16 %v853, %v852
        %v903 = vpack.c.bf16 %v855, %v854
        %v904 = vpack.c.bf16 %v857, %v856
        %v905 = vpack.c.bf16 %v859, %v858
        %v906 = vpack.c.bf16 %v861, %v860
        %v907 = vpack.c.bf16 %v863, %v862
        %v908 = vpack.c.bf16 %v865, %v864
        %v909 = vpack.c.bf16 %v867, %v866
        %v910 = vpack.c.bf16 %v869, %v868
        %v911 = vpack.c.bf16 %v871, %v870
        %v912 = vpack.c.bf16 %v873, %v872
        %v913 = vpack.c.bf16 %v875, %v874
        %v914 = vpack.c.bf16 %v877, %v876
        %v915 = vpack.c.bf16 %v879, %v878
        %v916 = vpack.c.bf16 %v881, %v880
        %v917 = vpack.c.bf16 %v883, %v882
        %v918 = vpack.c.bf16 %v885, %v884
        %v919 = vpack.c.bf16 %v887, %v886
        %v952 = vunpack.c.l.b16 %v888
        %v953 = vunpack.c.h.b16 %v888
        %v954 = vunpack.c.l.b16 %v889
        %v955 = vunpack.c.h.b16 %v889
        %v956 = vunpack.c.l.b16 %v890
        %v957 = vunpack.c.h.b16 %v890
        %v958 = vunpack.c.l.b16 %v891
        %v959 = vunpack.c.h.b16 %v891
        %v960 = vunpack.c.l.b16 %v892
        %v961 = vunpack.c.h.b16 %v892
        %v962 = vunpack.c.l.b16 %v893
        %v963 = vunpack.c.h.b16 %v893
        %v964 = vunpack.c.l.b16 %v894
        %v965 = vunpack.c.h.b16 %v894
        %v966 = vunpack.c.l.b16 %v895
        %v967 = vunpack.c.h.b16 %v895
        %v968 = vunpack.c.l.b16 %v896
        %v969 = vunpack.c.h.b16 %v896
        %v970 = vunpack.c.l.b16 %v897
        %v971 = vunpack.c.h.b16 %v897
        %v972 = vunpack.c.l.b16 %v898
        %v973 = vunpack.c.h.b16 %v898
        %v974 = vunpack.c.l.b16 %v899
        %v975 = vunpack.c.h.b16 %v899
        %v976 = vunpack.c.l.b16 %v900
        %v977 = vunpack.c.h.b16 %v900
        %v978 = vunpack.c.l.b16 %v901
        %v979 = vunpack.c.h.b16 %v901
        %v980 = vunpack.c.l.b16 %v902
        %v981 = vunpack.c.h.b16 %v902
        %v982 = vunpack.c.l.b16 %v903
        %v983 = vunpack.c.h.b16 %v903
        %v984 = vunpack.c.l.b16 %v904
        %v985 = vunpack.c.h.b16 %v904
        %v986 = vunpack.c.l.b16 %v905
        %v987 = vunpack.c.h.b16 %v905
        %v988 = vunpack.c.l.b16 %v906
        %v989 = vunpack.c.h.b16 %v906
        %v990 = vunpack.c.l.b16 %v907
        %v991 = vunpack.c.h.b16 %v907
        %v992 = vunpack.c.l.b16 %v908
        %v993 = vunpack.c.h.b16 %v908
        %v994 = vunpack.c.l.b16 %v909
        %v995 = vunpack.c.h.b16 %v909
        %v996 = vunpack.c.l.b16 %v910
        %v997 = vunpack.c.h.b16 %v910
        %v998 = vunpack.c.l.b16 %v911
        %v999 = vunpack.c.h.b16 %v911
        %v1000 = vunpack.c.l.b16 %v912
        %v1001 = vunpack.c.h.b16 %v912
        %v1002 = vunpack.c.l.b16 %v913
        %v1003 = vunpack.c.h.b16 %v913
        %v1004 = vunpack.c.l.b16 %v914
        %v1005 = vunpack.c.h.b16 %v914
        %v1006 = vunpack.c.l.b16 %v915
        %v1007 = vunpack.c.h.b16 %v915
        %v1008 = vunpack.c.l.b16 %v916
        %v1009 = vunpack.c.h.b16 %v916
        %v1010 = vunpack.c.l.b16 %v917
        %v1011 = vunpack.c.h.b16 %v917
        %v1012 = vunpack.c.l.b16 %v918
        %v1013 = vunpack.c.h.b16 %v918
        %v1014 = vunpack.c.l.b16 %v919
        %v1015 = vunpack.c.h.b16 %v919
        %v1016 = vpack.c.b16 %v952, %v952
        %v1017 = vpack.c.b16 %v953, %v953
        %v1018 = vpack.c.b16 %v954, %v954
        %v1019 = vpack.c.b16 %v955, %v955
        %v1020 = vpack.c.b16 %v956, %v956
        %v1021 = vpack.c.b16 %v957, %v957
        %v1022 = vpack.c.b16 %v958, %v958
        %v1023 = vpack.c.b16 %v959, %v959
        %v1024 = vpack.c.b16 %v960, %v960
        %v1025 = vpack.c.b16 %v961, %v961
        %v1026 = vpack.c.b16 %v962, %v962
        %v1027 = vpack.c.b16 %v963, %v963
        %v1028 = vpack.c.b16 %v964, %v964
        %v1029 = vpack.c.b16 %v965, %v965
        %v1030 = vpack.c.b16 %v966, %v966
        %v1031 = vpack.c.b16 %v967, %v967
        %v1032 = vpack.c.b16 %v968, %v968
        %v1033 = vpack.c.b16 %v969, %v969
        %v1034 = vpack.c.b16 %v970, %v970
        %v1035 = vpack.c.b16 %v971, %v971
        %v1036 = vpack.c.b16 %v972, %v972
        %v1037 = vpack.c.b16 %v973, %v973
        %v1038 = vpack.c.b16 %v974, %v974
        %v1039 = vpack.c.b16 %v975, %v975
        %v1040 = vpack.c.b16 %v976, %v976
        %v1041 = vpack.c.b16 %v977, %v977
        %v1042 = vpack.c.b16 %v978, %v978
        %v1043 = vpack.c.b16 %v979, %v979
        %v1044 = vpack.c.b16 %v980, %v980
        %v1045 = vpack.c.b16 %v981, %v981
        %v1046 = vpack.c.b16 %v982, %v982
        %v1047 = vpack.c.b16 %v983, %v983
        %v1048 = vpack.c.b16 %v984, %v984
        %v1049 = vpack.c.b16 %v985, %v985
        %v1050 = vpack.c.b16 %v986, %v986
        %v1051 = vpack.c.b16 %v987, %v987
        %v1052 = vpack.c.b16 %v988, %v988
        %v1053 = vpack.c.b16 %v989, %v989
        %v1054 = vpack.c.b16 %v990, %v990
        %v1055 = vpack.c.b16 %v991, %v991
        %v1056 = vpack.c.b16 %v992, %v992
        %v1057 = vpack.c.b16 %v993, %v993
        %v1058 = vpack.c.b16 %v994, %v994
        %v1059 = vpack.c.b16 %v995, %v995
        %v1060 = vpack.c.b16 %v996, %v996
        %v1061 = vpack.c.b16 %v997, %v997
        %v1062 = vpack.c.b16 %v998, %v998
        %v1063 = vpack.c.b16 %v999, %v999
        %v1064 = vpack.c.b16 %v1000, %v1000
        %v1065 = vpack.c.b16 %v1001, %v1001
        %v1066 = vpack.c.b16 %v1002, %v1002
        %v1067 = vpack.c.b16 %v1003, %v1003
        %v1068 = vpack.c.b16 %v1004, %v1004
        %v1069 = vpack.c.b16 %v1005, %v1005
        %v1070 = vpack.c.b16 %v1006, %v1006
        %v1071 = vpack.c.b16 %v1007, %v1007
        %v1072 = vpack.c.b16 %v1008, %v1008
        %v1073 = vpack.c.b16 %v1009, %v1009
        %v1074 = vpack.c.b16 %v1010, %v1010
        %v1075 = vpack.c.b16 %v1011, %v1011
        %v1076 = vpack.c.b16 %v1012, %v1012
        %v1077 = vpack.c.b16 %v1013, %v1013
        %v1078 = vpack.c.b16 %v1014, %v1014
        %v1079 = vpack.c.b16 %v1015, %v1015
        %1144 = vst [vmem:[%s204] sm:$0xf] %v1016
        %1145 = vst [vmem:[%s204 + $0x4] sm:$0xf] %v1017
        %1146 = vst [vmem:[%s204 + $0x8] sm:$0xf] %v1018
        %1147 = vst [vmem:[%s204 + $0xc] sm:$0xf] %v1019
        %1148 = vst [vmem:[%s204 + $0x10] sm:$0xf] %v1020
        %1149 = vst [vmem:[%s204 + $0x14] sm:$0xf] %v1021
        %1150 = vst [vmem:[%s204 + $0x18] sm:$0xf] %v1022
        %1151 = vst [vmem:[%s204 + $0x1c] sm:$0xf] %v1023
        %1152 = vst [vmem:[%s204 + $0x20] sm:$0xf] %v1024
        %1153 = vst [vmem:[%s204 + $0x24] sm:$0xf] %v1025
        %1154 = vst [vmem:[%s204 + $0x28] sm:$0xf] %v1026
        %1155 = vst [vmem:[%s204 + $0x2c] sm:$0xf] %v1027
        %1156 = vst [vmem:[%s204 + $0x30] sm:$0xf] %v1028
        %1157 = vst [vmem:[%s204 + $0x34] sm:$0xf] %v1029
        %1158 = vst [vmem:[%s204 + $0x38] sm:$0xf] %v1030
        %1159 = vst [vmem:[%s204 + $0x3c] sm:$0xf] %v1031
        %1160 = vst [vmem:[%s204 + $0x40] sm:$0xf] %v1032
        %1161 = vst [vmem:[%s204 + $0x44] sm:$0xf] %v1033
        %1162 = vst [vmem:[%s204 + $0x48] sm:$0xf] %v1034
        %1163 = vst [vmem:[%s204 + $0x4c] sm:$0xf] %v1035
        %1164 = vst [vmem:[%s204 + $0x50] sm:$0xf] %v1036
        %1165 = vst [vmem:[%s204 + $0x54] sm:$0xf] %v1037
        %1166 = vst [vmem:[%s204 + $0x58] sm:$0xf] %v1038
        %1167 = vst [vmem:[%s204 + $0x5c] sm:$0xf] %v1039
        %1168 = vst [vmem:[%s204 + $0x60] sm:$0xf] %v1040
        %1169 = vst [vmem:[%s204 + $0x64] sm:$0xf] %v1041
        %1170 = vst [vmem:[%s204 + $0x68] sm:$0xf] %v1042
        %1171 = vst [vmem:[%s204 + $0x6c] sm:$0xf] %v1043
        %1172 = vst [vmem:[%s204 + $0x70] sm:$0xf] %v1044
        %1173 = vst [vmem:[%s204 + $0x74] sm:$0xf] %v1045
        %1174 = vst [vmem:[%s204 + $0x78] sm:$0xf] %v1046
        %1175 = vst [vmem:[%s204 + $0x7c] sm:$0xf] %v1047
        %1176 = vst [vmem:[%s204 + $0x80] sm:$0xf] %v1048
        %1177 = vst [vmem:[%s204 + $0x84] sm:$0xf] %v1049
        %1178 = vst [vmem:[%s204 + $0x88] sm:$0xf] %v1050
        %1179 = vst [vmem:[%s204 + $0x8c] sm:$0xf] %v1051
        %1180 = vst [vmem:[%s204 + $0x90] sm:$0xf] %v1052
        %1181 = vst [vmem:[%s204 + $0x94] sm:$0xf] %v1053
        %1182 = vst [vmem:[%s204 + $0x98] sm:$0xf] %v1054
        %1183 = vst [vmem:[%s204 + $0x9c] sm:$0xf] %v1055
        %1184 = vst [vmem:[%s204 + $0xa0] sm:$0xf] %v1056
        %1185 = vst [vmem:[%s204 + $0xa4] sm:$0xf] %v1057
        %1186 = vst [vmem:[%s204 + $0xa8] sm:$0xf] %v1058
        %1187 = vst [vmem:[%s204 + $0xac] sm:$0xf] %v1059
        %1188 = vst [vmem:[%s204 + $0xb0] sm:$0xf] %v1060
        %1189 = vst [vmem:[%s204 + $0xb4] sm:$0xf] %v1061
        %1190 = vst [vmem:[%s204 + $0xb8] sm:$0xf] %v1062
        %1191 = vst [vmem:[%s204 + $0xbc] sm:$0xf] %v1063
        %1192 = vst [vmem:[%s204 + $0xc0] sm:$0xf] %v1064
        %1193 = vst [vmem:[%s204 + $0xc4] sm:$0xf] %v1065
        %1194 = vst [vmem:[%s204 + $0xc8] sm:$0xf] %v1066
        %1195 = vst [vmem:[%s204 + $0xcc] sm:$0xf] %v1067
        %1196 = vst [vmem:[%s204 + $0xd0] sm:$0xf] %v1068
        %1197 = vst [vmem:[%s204 + $0xd4] sm:$0xf] %v1069
        %1198 = vst [vmem:[%s204 + $0xd8] sm:$0xf] %v1070
        %1199 = vst [vmem:[%s204 + $0xdc] sm:$0xf] %v1071
        %1200 = vst [vmem:[%s204 + $0xe0] sm:$0xf] %v1072
        %1201 = vst [vmem:[%s204 + $0xe4] sm:$0xf] %v1073
        %1202 = vst [vmem:[%s204 + $0xe8] sm:$0xf] %v1074
        %1203 = vst [vmem:[%s204 + $0xec] sm:$0xf] %v1075
        %1204 = vst [vmem:[%s204 + $0xf0] sm:$0xf] %v1076
        %1205 = vst [vmem:[%s204 + $0xf4] sm:$0xf] %v1077
        %1206 = vst [vmem:[%s204 + $0xf8] sm:$0xf] %v1078
        %1207 = vst [vmem:[%s204 + $0xfc] sm:$0xf] %v1079
        %s1208 = sand.u32 %s97, 1
        %s1209 = scalar_lea.sflag [#allocation4], %s1208
        %s1210 = sand.u32 %s97, 1
        %s1211 = smul.addr %s1210, 256
        %s1212 = scalar_lea.vmem [#allocation7], %s1211
        // Predicated region
        $region41: #{tpu_custom_call.1} parent=31 // pred_check
          %p1213 = pneg %p107
        $region42: #{tpu_custom_call.1} parent=31 // pred_check_branch
          %1215 = sbr.rel (%p1213) target = $region44
        $region43: #{tpu_custom_call.1} parent=31 // pred_region
          %s1216 = smul.u32 2, %s21
          %s1218 = ssub.s32 4096, 4096
          %1219 = vsyncadd %s1209, %s1218
          %s1220 = smul.addr %s1216, 32
          %s1221 = smul.addr %s1220, 64
          %s1222 = scalar_lea.hbm %s3, %s1221
          %s1223 = sshll.u32 %s1212, 4
          %s1224 = int_to_ptr.vmem [resolvable:$true] %s1223
          %1229 = dma.vmem_to_hbm [thread:$0]  %s1224, 4096, %s1222, %s1209, 64, 64, 4
        $region44: #{tpu_custom_call.1} parent=31 // pred_fallthru
          _
      $region32: #{tpu_custom_call.1} parent=5 // pred_fallthru
        _
      %p1230 = scmp.le.s32.totalorder 2, %s16
      // Predicated region
      $region45: #{tpu_custom_call.1} parent=5 // pred_check
        %p1231 = pneg %p1230
      $region46: #{tpu_custom_call.1} parent=5 // pred_check_branch
        %1233 = sbr.rel (%p1231) target = $region48
      $region47: #{tpu_custom_call.1} parent=5 // pred_region
        %s1234 = ssub.s32 %s16, 2
        // Predicated region
        $region49: #{tpu_custom_call.1} parent=47 // pred_check
          %p1235 = pneg %p113
        $region50: #{tpu_custom_call.1} parent=47 // pred_check_branch
          %1237 = sbr.rel (%p1235) target = $region52
        $region51: #{tpu_custom_call.1} parent=47 // pred_region
          %s1238 = sand.u32 %s98, 1
          %s1239 = scalar_lea.sflag [#allocation4], %s1238
          %s1240 = sand.u32 %s98, 1
          %s1241 = smul.addr %s1240, 256
          %s1242 = scalar_lea.vmem [#allocation7], %s1241
          %1243 = dma.done %s1239, 4096
        $region52: #{tpu_custom_call.1} parent=47 // pred_fallthru
          _
      $region48: #{tpu_custom_call.1} parent=5 // pred_fallthru
        _
    $region6: #{tpu_custom_call.1} parent=1 // loop_footer
      %s20 = sadd.s32 1, %s16
    $region7: #{tpu_custom_call.1} parent=1 // loop_footer_branch
      %15 = sbr.rel target = $region3
    $region8: #{tpu_custom_call.1} parent=1 // loop_exit
      _
    %1244 = vsyncpa [#allocation3], 1
    %s1245 = scalar_lea.sflag [#allocation3], 1
    %1246 = vsyncpa %s1245, 1
    %1247 = vsyncpa [#allocation6], 1
    %1248 = vsyncpa [#allocation4], 1
    %s1249 = scalar_lea.sflag [#allocation4], 1
    %1250 = vsyncpa %s1249, 1

</llo_original>
